<compile_context>
chip_gen: v5e
topology: v5e:2x2
jax: 0.10.0
libtpu: 0.0.40
codegen_flags: <defaults>
</compile_context>

<pallas_src>
import jax
import jax.numpy as jnp
import numpy as np
from jax.experimental import pallas as pl
from jax.experimental.pallas import tpu as pltpu

_EPS = 1e-5
_MAX_TILE = 16384        # max pixels per grid step (lane axis); multiple of 128
_MIN_GRID_STEPS = 4      # keep >= 2x TensorCores worth of "parallel" steps (v7x)
_OUT_DTYPE = jnp.float32


# ---------------------------------------------------------------------------
# Fused Pallas kernel: all three (1x1 conv + BN + ReLU) stages, both inputs,
# on one pixel tile.  Intermediates h1/h2 never leave VMEM/vregs.
# ---------------------------------------------------------------------------
def _encoder_kernel(a_ref, b_ref, s1_ref, b1_ref, w2_ref, b2_ref, w3_ref,
                    b3_ref, o_ref):
    def encode(x):                                                   # (1, T)
        # Stage 1: 1 -> 8 channels (4 real + 4 zero-padded), VPU broadcast FMA.
        h1 = jnp.maximum(s1_ref[...] * x + b1_ref[...], 0.0)        # (8, T)
        # Stage 2: 8 -> 8 channels (4 real in), MXU matmul, lane-dense N.
        h2 = jnp.dot(w2_ref[...], h1,
                     preferred_element_type=jnp.float32) + b2_ref[...]
        h2 = jnp.maximum(h2, 0.0)                                    # (8, T)
        # Stage 3: 8 -> 16 channels.
        h3 = jnp.dot(w3_ref[...], h2,
                     preferred_element_type=jnp.float32) + b3_ref[...]
        return jnp.maximum(h3, 0.0)                                  # (16, T)

    # o_ref is (2, 16, T): row 0 <- enc(a tile), row 1 <- enc(b tile).
    o_ref[0] = encode(a_ref[...]).astype(o_ref.dtype)
    o_ref[1] = encode(b_ref[...]).astype(o_ref.dtype)


# ---------------------------------------------------------------------------
# Plain-JAX glue (BN folding, layout, tiling)
# ---------------------------------------------------------------------------
def _round_up(x, m):
    return ((x + m - 1) // m) * m


def _fold_stage(params, i):
    # eval-mode BN folded into the 1x1 conv:  y = (W*s) @ x + (beta - mean*s)
    s = params[f"gamma{i}"] / jnp.sqrt(params[f"var{i}"] + _EPS)
    bias = params[f"beta{i}"] - params[f"mean{i}"] * s
    w = params[f"w{i}"] * s[:, None]                                 # (co, ci)
    return w.astype(jnp.float32), bias[:, None].astype(jnp.float32)


def init_params(key):
    ks = jax.random.split(key, 15)
    f32 = jnp.float32
    p = {}
    chans = [(1, 4), (4, 8), (8, 16)]                                # EncMod i=0,1,2
    for i, (ci, co) in enumerate(chans):
        k = ks[5 * i:5 * i + 5]
        p[f"w{i}"] = 0.3 * jax.random.normal(k[0], (co, ci), f32)    # Conv2d 1x1 (OI)
        p[f"gamma{i}"] = 1.0 + 0.1 * jax.random.normal(k[1], (co,), f32)
        p[f"beta{i}"] = 0.1 * jax.random.normal(k[2], (co,), f32)
        p[f"mean{i}"] = 0.1 * jax.random.normal(k[3], (co,), f32)
        p[f"var{i}"] = 0.9 + 0.2 * jax.random.uniform(k[4], (co,), f32)
    return p


@jax.jit
def encoder_sub_track_c(params, a_nchw, b_nchw):
    assert a_nchw.shape == b_nchw.shape
    n, c, h, w = a_nchw.shape
    assert c == 1
    hw = h * w

    # Lane-dense layout: the pixel axis sits on the 128-lane axis.
    a_flat = a_nchw.astype(jnp.float32).reshape(n, 1, hw)
    b_flat = b_nchw.astype(jnp.float32).reshape(n, 1, hw)

    # BN-folded weights / biases.
    w1, c1 = _fold_stage(params, 0)                                  # (4,1), (4,1)
    w2, c2 = _fold_stage(params, 1)                                  # (8,4), (8,1)
    w3, c3 = _fold_stage(params, 2)                                  # (16,8), (16,1)
    # Pad stage-1 channels 4 -> 8 so sublane dims are tile-aligned.  Padded
    # channels are relu(0*x + 0) = 0 and hit zero weight columns in w2.
    s1 = jnp.pad(w1, ((0, 4), (0, 0)))                               # (8, 1)
    b1 = jnp.pad(c1, ((0, 4), (0, 0)))                               # (8, 1)
    w2p = jnp.pad(w2, ((0, 0), (0, 4)))                              # (8, 8)

    # Pixel-tile sizing: as big as possible for long DMA bursts, but keep the
    # total "parallel" grid at >= _MIN_GRID_STEPS steps so v7x's 2 TCs both
    # get work even for small batches.
    hw_pad = _round_up(hw, 128)
    hw_tiles_target = max(1, -(-_MIN_GRID_STEPS // n))
    tile = min(_MAX_TILE, _round_up(-(-hw_pad // hw_tiles_target), 128))
    hw_tiles = -(-hw_pad // tile)
    rows_p = hw_tiles * tile
    if rows_p != hw:
        pad = ((0, 0), (0, 0), (0, rows_p - hw))
        a_flat = jnp.pad(a_flat, pad)
        b_flat = jnp.pad(b_flat, pad)

    total_px = 2 * n * rows_p
    out_bytes = np.dtype(_OUT_DTYPE).itemsize
    cost = pl.CostEstimate(
        flops=2 * total_px * (8 * 8 + 16 * 8) + 6 * total_px * 8,
        transcendentals=0,
        bytes_accessed=total_px * (4 + 16 * out_bytes),
    )

    out = pl.pallas_call(
        _encoder_kernel,
        out_shape=jax.ShapeDtypeStruct((2, n, 16, rows_p), _OUT_DTYPE),
        grid=(n, hw_tiles),
        in_specs=[
            pl.BlockSpec((None, 1, tile), lambda i, t: (i, 0, t)),   # a pixels
            pl.BlockSpec((None, 1, tile), lambda i, t: (i, 0, t)),   # b pixels
            pl.BlockSpec((8, 1), lambda i, t: (0, 0)),               # stage-1 scale
            pl.BlockSpec((8, 1), lambda i, t: (0, 0)),               # stage-1 bias
            pl.BlockSpec((8, 8), lambda i, t: (0, 0)),               # stage-2 weights
            pl.BlockSpec((8, 1), lambda i, t: (0, 0)),               # stage-2 bias
            pl.BlockSpec((16, 8), lambda i, t: (0, 0)),              # stage-3 weights
            pl.BlockSpec((16, 1), lambda i, t: (0, 0)),              # stage-3 bias
        ],
        out_specs=pl.BlockSpec((2, None, 16, tile), lambda i, t: (0, i, 0, t)),
        compiler_params=pltpu.CompilerParams(
            dimension_semantics=("parallel", "parallel")),
        cost_estimate=cost,
    )(a_flat, b_flat, s1, b1, w2p, c2, w3, c3)

    # (2, n, 16, rows_p): axis 0 = [enc(a), enc(b)].  Trim the pixel pad and
    # reshape -- this is exactly torch.concat((enc(a), enc(b)), dim=0) in NCHW,
    # with no transpose.
    out = out[..., :hw].reshape(2 * n, 16, h, w)
    return out


# ---------------------------------------------------------------------------
# Independent NumPy (float64) reference of the PyTorch forward semantics
# ---------------------------------------------------------------------------
def reference_forward(params, a, b):
    x = np.concatenate([np.asarray(a, np.float64), np.asarray(b, np.float64)],
                       axis=0)
    for i in range(3):
        w = np.asarray(params[f"w{i}"], np.float64)                  # (co, ci)
        g = np.asarray(params[f"gamma{i}"], np.float64)
        be = np.asarray(params[f"beta{i}"], np.float64)
        m = np.asarray(params[f"mean{i}"], np.float64)
        v = np.asarray(params[f"var{i}"], np.float64)
        y = np.einsum("nchw,oc->nohw", x, w)                         # 1x1 conv, no bias
        y = ((y - m[None, :, None, None]) / np.sqrt(v + _EPS)[None, :, None, None]
             * g[None, :, None, None] + be[None, :, None, None])
        x = np.maximum(y, 0.0)                                       # MaxPool2d(1) == identity
    return x


if __name__ == "__main__":
    key = jax.random.PRNGKey(0)
    pkey, akey, bkey = jax.random.split(key, 3)
    params = init_params(pkey)
    a = jax.random.normal(akey, (2, 1, 16, 16), jnp.float32)         # NCHW, 1 input channel
    b = jax.random.normal(bkey, (2, 1, 16, 16), jnp.float32)

    out = jax.block_until_ready(encoder_sub_track_c(params, a, b))
    assert out.shape == (4, 16, 16, 16), out.shape

    ref = reference_forward(params, a, b)
    err = float(np.max(np.abs(np.asarray(out, np.float64) - ref)))
    assert np.isfinite(err) and err < 1e-3, f"max abs error {err}"
    print("KERNEL_OK")
</pallas_src>

<mosaic_0001>
module attributes {stable_mosaic.version = 11 : i64} {
  func.func @_encoder_kernel(%arg0: i32, %arg1: i32, %arg2: memref<1x1x128xf32, #tpu.memory_space<vmem>>, %arg3: memref<1x1x128xf32, #tpu.memory_space<vmem>>, %arg4: memref<8x1xf32, #tpu.memory_space<vmem>>, %arg5: memref<8x1xf32, #tpu.memory_space<vmem>>, %arg6: memref<8x8xf32, #tpu.memory_space<vmem>>, %arg7: memref<8x1xf32, #tpu.memory_space<vmem>>, %arg8: memref<16x8xf32, #tpu.memory_space<vmem>>, %arg9: memref<16x1xf32, #tpu.memory_space<vmem>>, %arg10: memref<2x1x16x128xf32, #tpu.memory_space<vmem>>) attributes {dimension_semantics = [#tpu.dimension_semantics<parallel>, #tpu.dimension_semantics<parallel>], iteration_bounds = array<i64: 2, 2>, scalar_prefetch = 0 : i64, scratch_operands = 0 : i64, tpu.core_type = #tpu.core_type<tc>, window_params = [{transform_indices = @transform_0, window_bounds = array<i64: 1, 1, 128>}, {transform_indices = @transform_1, window_bounds = array<i64: 1, 1, 128>}, {pipeline_mode = #tpu.pipeline_mode<synchronous>, transform_indices = @transform_2, window_bounds = array<i64: 8, 1>}, {pipeline_mode = #tpu.pipeline_mode<synchronous>, transform_indices = @transform_3, window_bounds = array<i64: 8, 1>}, {pipeline_mode = #tpu.pipeline_mode<synchronous>, transform_indices = @transform_4, window_bounds = array<i64: 8, 8>}, {pipeline_mode = #tpu.pipeline_mode<synchronous>, transform_indices = @transform_5, window_bounds = array<i64: 8, 1>}, {pipeline_mode = #tpu.pipeline_mode<synchronous>, transform_indices = @transform_6, window_bounds = array<i64: 16, 8>}, {pipeline_mode = #tpu.pipeline_mode<synchronous>, transform_indices = @transform_7, window_bounds = array<i64: 16, 1>}, {transform_indices = @transform_8, window_bounds = array<i64: 2, 1, 16, 128>}]} {
    %c0 = arith.constant 0 : index
    %c0_0 = arith.constant 0 : index
    %c0_1 = arith.constant 0 : index
    %0 = vector.load %arg2[%c0, %c0_0, %c0_1] : memref<1x1x128xf32, #tpu.memory_space<vmem>>, vector<1x1x128xf32>
    %1 = vector.shape_cast %0 : vector<1x1x128xf32> to vector<1x128xf32>
    %c0_2 = arith.constant 0 : index
    %c0_3 = arith.constant 0 : index
    %2 = vector.load %arg4[%c0_2, %c0_3] : memref<8x1xf32, #tpu.memory_space<vmem>>, vector<8x1xf32>
    %3 = vector.broadcast %2 : vector<8x1xf32> to vector<8x128xf32>
    %4 = vector.broadcast %1 : vector<1x128xf32> to vector<8x128xf32>
    %5 = arith.mulf %3, %4 : vector<8x128xf32>
    %c0_4 = arith.constant 0 : index
    %c0_5 = arith.constant 0 : index
    %6 = vector.load %arg5[%c0_4, %c0_5] : memref<8x1xf32, #tpu.memory_space<vmem>>, vector<8x1xf32>
    %7 = vector.broadcast %6 : vector<8x1xf32> to vector<8x128xf32>
    %8 = arith.addf %5, %7 : vector<8x128xf32>
    %cst = arith.constant 0.000000e+00 : f32
    %9 = vector.broadcast %cst : f32 to vector<8x128xf32>
    %10 = arith.maximumf %8, %9 : vector<8x128xf32>
    %c0_6 = arith.constant 0 : index
    %c0_7 = arith.constant 0 : index
    %11 = vector.load %arg6[%c0_6, %c0_7] : memref<8x8xf32, #tpu.memory_space<vmem>>, vector<8x8xf32>
    %cst_8 = arith.constant dense<0.000000e+00> : vector<8x128xf32>
    %12 = tpu.matmul %11, %10, %cst_8 {dimension_numbers = #tpu.dot_dimension_numbers<[1], [0], [0], [1], [0, 0, 1, 1], [], []>} : vector<8x8xf32>, vector<8x128xf32>, vector<8x128xf32> -> vector<8x128xf32>
    %c0_9 = arith.constant 0 : index
    %c0_10 = arith.constant 0 : index
    %13 = vector.load %arg7[%c0_9, %c0_10] : memref<8x1xf32, #tpu.memory_space<vmem>>, vector<8x1xf32>
    %14 = vector.broadcast %13 : vector<8x1xf32> to vector<8x128xf32>
    %15 = arith.addf %12, %14 : vector<8x128xf32>
    %cst_11 = arith.constant 0.000000e+00 : f32
    %16 = vector.broadcast %cst_11 : f32 to vector<8x128xf32>
    %17 = arith.maximumf %15, %16 : vector<8x128xf32>
    %c0_12 = arith.constant 0 : index
    %c0_13 = arith.constant 0 : index
    %18 = vector.load %arg8[%c0_12, %c0_13] : memref<16x8xf32, #tpu.memory_space<vmem>>, vector<16x8xf32>
    %cst_14 = arith.constant dense<0.000000e+00> : vector<16x128xf32>
    %19 = tpu.matmul %18, %17, %cst_14 {dimension_numbers = #tpu.dot_dimension_numbers<[1], [0], [0], [1], [0, 0, 1, 1], [], []>} : vector<16x8xf32>, vector<8x128xf32>, vector<16x128xf32> -> vector<16x128xf32>
    %c0_15 = arith.constant 0 : index
    %c0_16 = arith.constant 0 : index
    %20 = vector.load %arg9[%c0_15, %c0_16] : memref<16x1xf32, #tpu.memory_space<vmem>>, vector<16x1xf32>
    %21 = vector.broadcast %20 : vector<16x1xf32> to vector<16x128xf32>
    %22 = arith.addf %19, %21 : vector<16x128xf32>
    %cst_17 = arith.constant 0.000000e+00 : f32
    %23 = vector.broadcast %cst_17 : f32 to vector<16x128xf32>
    %24 = arith.maximumf %22, %23 : vector<16x128xf32>
    %c0_18 = arith.constant 0 : index
    %c0_19 = arith.constant 0 : index
    %c0_20 = arith.constant 0 : index
    %c0_21 = arith.constant 0 : index
    %25 = vector.load %arg10[%c0_18, %c0_19, %c0_20, %c0_21] : memref<2x1x16x128xf32, #tpu.memory_space<vmem>>, vector<1x1x16x128xf32>
    %26 = vector.shape_cast %25 : vector<1x1x16x128xf32> to vector<16x128xf32>
    %27 = vector.shape_cast %24 : vector<16x128xf32> to vector<1x1x16x128xf32>
    tpu.vector_store %arg10[%c0_18, %c0_19, %c0_20, %c0_21], %27 {strides = array<i32>} : memref<2x1x16x128xf32, #tpu.memory_space<vmem>>, vector<1x1x16x128xf32>,
    %c0_22 = arith.constant 0 : index
    %c0_23 = arith.constant 0 : index
    %c0_24 = arith.constant 0 : index
    %28 = vector.load %arg3[%c0_22, %c0_23, %c0_24] : memref<1x1x128xf32, #tpu.memory_space<vmem>>, vector<1x1x128xf32>
    %29 = vector.shape_cast %28 : vector<1x1x128xf32> to vector<1x128xf32>
    %c0_25 = arith.constant 0 : index
    %c0_26 = arith.constant 0 : index
    %30 = vector.load %arg4[%c0_25, %c0_26] : memref<8x1xf32, #tpu.memory_space<vmem>>, vector<8x1xf32>
    %31 = vector.broadcast %30 : vector<8x1xf32> to vector<8x128xf32>
    %32 = vector.broadcast %29 : vector<1x128xf32> to vector<8x128xf32>
    %33 = arith.mulf %31, %32 : vector<8x128xf32>
    %c0_27 = arith.constant 0 : index
    %c0_28 = arith.constant 0 : index
    %34 = vector.load %arg5[%c0_27, %c0_28] : memref<8x1xf32, #tpu.memory_space<vmem>>, vector<8x1xf32>
    %35 = vector.broadcast %34 : vector<8x1xf32> to vector<8x128xf32>
    %36 = arith.addf %33, %35 : vector<8x128xf32>
    %cst_29 = arith.constant 0.000000e+00 : f32
    %37 = vector.broadcast %cst_29 : f32 to vector<8x128xf32>
    %38 = arith.maximumf %36, %37 : vector<8x128xf32>
    %c0_30 = arith.constant 0 : index
    %c0_31 = arith.constant 0 : index
    %39 = vector.load %arg6[%c0_30, %c0_31] : memref<8x8xf32, #tpu.memory_space<vmem>>, vector<8x8xf32>
    %cst_32 = arith.constant dense<0.000000e+00> : vector<8x128xf32>
    %40 = tpu.matmul %39, %38, %cst_32 {dimension_numbers = #tpu.dot_dimension_numbers<[1], [0], [0], [1], [0, 0, 1, 1], [], []>} : vector<8x8xf32>, vector<8x128xf32>, vector<8x128xf32> -> vector<8x128xf32>
    %c0_33 = arith.constant 0 : index
    %c0_34 = arith.constant 0 : index
    %41 = vector.load %arg7[%c0_33, %c0_34] : memref<8x1xf32, #tpu.memory_space<vmem>>, vector<8x1xf32>
    %42 = vector.broadcast %41 : vector<8x1xf32> to vector<8x128xf32>
    %43 = arith.addf %40, %42 : vector<8x128xf32>
    %cst_35 = arith.constant 0.000000e+00 : f32
    %44 = vector.broadcast %cst_35 : f32 to vector<8x128xf32>
    %45 = arith.maximumf %43, %44 : vector<8x128xf32>
    %c0_36 = arith.constant 0 : index
    %c0_37 = arith.constant 0 : index
    %46 = vector.load %arg8[%c0_36, %c0_37] : memref<16x8xf32, #tpu.memory_space<vmem>>, vector<16x8xf32>
    %cst_38 = arith.constant dense<0.000000e+00> : vector<16x128xf32>
    %47 = tpu.matmul %46, %45, %cst_38 {dimension_numbers = #tpu.dot_dimension_numbers<[1], [0], [0], [1], [0, 0, 1, 1], [], []>} : vector<16x8xf32>, vector<8x128xf32>, vector<16x128xf32> -> vector<16x128xf32>
    %c0_39 = arith.constant 0 : index
    %c0_40 = arith.constant 0 : index
    %48 = vector.load %arg9[%c0_39, %c0_40] : memref<16x1xf32, #tpu.memory_space<vmem>>, vector<16x1xf32>
    %49 = vector.broadcast %48 : vector<16x1xf32> to vector<16x128xf32>
    %50 = arith.addf %47, %49 : vector<16x128xf32>
    %cst_41 = arith.constant 0.000000e+00 : f32
    %51 = vector.broadcast %cst_41 : f32 to vector<16x128xf32>
    %52 = arith.maximumf %50, %51 : vector<16x128xf32>
    %c1 = arith.constant 1 : index
    %c0_42 = arith.constant 0 : index
    %c0_43 = arith.constant 0 : index
    %c0_44 = arith.constant 0 : index
    %53 = vector.load %arg10[%c1, %c0_42, %c0_43, %c0_44] : memref<2x1x16x128xf32, #tpu.memory_space<vmem>>, vector<1x1x16x128xf32>
    %54 = vector.shape_cast %53 : vector<1x1x16x128xf32> to vector<16x128xf32>
    %55 = vector.shape_cast %52 : vector<16x128xf32> to vector<1x1x16x128xf32>
    tpu.vector_store %arg10[%c1, %c0_42, %c0_43, %c0_44], %55 {strides = array<i32>} : memref<2x1x16x128xf32, #tpu.memory_space<vmem>>, vector<1x1x16x128xf32>,
    return
  }
  func.func @transform_0(%arg0: i32, %arg1: i32) -> (i32, i32, i32) {
    %c0_i32 = arith.constant 0 : i32
    %c0_i32_0 = arith.constant 0 : i32
    return %arg0, %c0_i32, %arg1 : i32, i32, i32
  }
  func.func @transform_1(%arg0: i32, %arg1: i32) -> (i32, i32, i32) {
    %c0_i32 = arith.constant 0 : i32
    %c0_i32_0 = arith.constant 0 : i32
    return %arg0, %c0_i32, %arg1 : i32, i32, i32
  }
  func.func @transform_2(%arg0: i32, %arg1: i32) -> (i32, i32) {
    %c0_i32 = arith.constant 0 : i32
    %c0_i32_0 = arith.constant 0 : i32
    %c0_i32_1 = arith.constant 0 : i32
    return %c0_i32, %c0_i32_0 : i32, i32
  }
  func.func @transform_3(%arg0: i32, %arg1: i32) -> (i32, i32) {
    %c0_i32 = arith.constant 0 : i32
    %c0_i32_0 = arith.constant 0 : i32
    %c0_i32_1 = arith.constant 0 : i32
    return %c0_i32, %c0_i32_0 : i32, i32
  }
  func.func @transform_4(%arg0: i32, %arg1: i32) -> (i32, i32) {
    %c0_i32 = arith.constant 0 : i32
    %c0_i32_0 = arith.constant 0 : i32
    %c0_i32_1 = arith.constant 0 : i32
    return %c0_i32, %c0_i32_0 : i32, i32
  }
  func.func @transform_5(%arg0: i32, %arg1: i32) -> (i32, i32) {
    %c0_i32 = arith.constant 0 : i32
    %c0_i32_0 = arith.constant 0 : i32
    %c0_i32_1 = arith.constant 0 : i32
    return %c0_i32, %c0_i32_0 : i32, i32
  }
  func.func @transform_6(%arg0: i32, %arg1: i32) -> (i32, i32) {
    %c0_i32 = arith.constant 0 : i32
    %c0_i32_0 = arith.constant 0 : i32
    %c0_i32_1 = arith.constant 0 : i32
    return %c0_i32, %c0_i32_0 : i32, i32
  }
  func.func @transform_7(%arg0: i32, %arg1: i32) -> (i32, i32) {
    %c0_i32 = arith.constant 0 : i32
    %c0_i32_0 = arith.constant 0 : i32
    %c0_i32_1 = arith.constant 0 : i32
    return %c0_i32, %c0_i32_0 : i32, i32
  }
  func.func @transform_8(%arg0: i32, %arg1: i32) -> (i32, i32, i32, i32) {
    %c0_i32 = arith.constant 0 : i32
    %c0_i32_0 = arith.constant 0 : i32
    %c0_i32_1 = arith.constant 0 : i32
    return %c0_i32, %arg0, %c0_i32_0, %arg1 : i32, i32, i32, i32
  }
}

</mosaic_0001>

<llo_original>
// kernel: mul.13
$region0: #{mul.13}
  #allocation0 [shape = 's32[1]{0}', space=sflag, size = 0x4, scoped, tag = 'scoped memory for mul.13']
  %s0 = inlined_call_operand.vmem [shape: f32[4,1], index: 0, kind: input, shape index: {}]
  %s1 = inlined_call_operand.vmem [shape: f32[4,1], index: 1, kind: input, shape index: {}]
  %s2 = inlined_call_operand.vmem [shape: f32[4,1], index: 2, kind: output, shape index: {}]
  %v3 = vld [vmem:[%s0] sm:$0xf]
  %v4 = vld [vmem:[%s1] sm:$0xf]
  %5 = xla_tuple %v3, %v4
  %6 = xla_tuple %5
  %v7 = vmul.f32 %v3, %v4
  %8 = xla_tuple %v7
  %9 = vst [vmem:[%s2] sm:$0xf] %v7

// kernel: encoder_sub_track_c.1
$region0: #{encoder_sub_track_c.1}
  #allocation0 [shape = 'u32[]', space=smem, size = 0x4, offset = 0x4, fixed_abs, tag = 'smem constant byte address 0x4 - core index']
  #allocation1 [shape = 'u32[72,128]{1,0:T(1,128)}', space=vmem, size = 0x9000, scoped, tag = 'internal scratch']
  %s0 = inlined_call_operand.vmem [shape: f32[2,1,256], index: 0, kind: input, shape index: {}]
  %s1 = inlined_call_operand.vmem [shape: f32[2,1,256], index: 1, kind: input, shape index: {}]
  %s2 = inlined_call_operand.vmem [shape: f32[8,1], index: 2, kind: input, shape index: {}]
  %s3 = inlined_call_operand.vmem [shape: f32[8,1], index: 3, kind: input, shape index: {}]
  %s4 = inlined_call_operand.vmem [shape: f32[8,8], index: 4, kind: input, shape index: {}]
  %s5 = inlined_call_operand.vmem [shape: f32[8,1], index: 5, kind: input, shape index: {}]
  %s6 = inlined_call_operand.vmem [shape: f32[16,8], index: 6, kind: input, shape index: {}]
  %s7 = inlined_call_operand.vmem [shape: f32[16,1], index: 7, kind: input, shape index: {}]
  %s8 = inlined_call_operand.vmem [shape: f32[2,2,16,256], index: 8, kind: output, shape index: {}]
  %s9 = sld [smem:[#allocation0]]
  $region99: #{encoder_sub_track_c.1} parent=0
    _
  %s11 = ssub.s32 1, %s9
  %s12 = scalar_select 0, %s11, %s9
  $region1: #{encoder_sub_track_c.1} parent=0
    #allocation2 [shape = 'u8[32768]{0}', space=vmem, size = 0x8000, scoped, tag = 'output window, operand 0']
    loop: start=0, step=1, limit=6
    $region2: #{encoder_sub_track_c.1} parent=1 // loop_pre_header
      _
    $region3: #{encoder_sub_track_c.1} parent=1 // loop_header
      %s14 = sphi 0, %s18
      %p15 = scmp.ge.s32.totalorder %s14, 6
      %s21 = sphi 0, %s33
      %s22 = sphi 0, %s29
      %s23 = sphi 0, %s21
      %s24 = sphi 0, %s22
      %s25 = sphi 0, %s23
      %s26 = sphi 0, %s24
      %s38 = sphi 0, %s40
      %s41 = sphi 0, %s38
      %s42 = sphi 0, %s41
      %s58 = sphi 0, %s42
      %s66 = sphi 0, %s68
      %s69 = sphi 0, %s66
      %s70 = sphi 0, %s69
      %s86 = sphi 0, %s70
      %s90 = sphi 0, %s90
      %s92 = sphi 0, %s90
      %s93 = sphi 0, %s92
      %s107 = sphi 0, %s93
      %s111 = sphi 0, %s111
      %s113 = sphi 0, %s111
      %s114 = sphi 0, %s113
      %s128 = sphi 0, %s114
      %s132 = sphi 0, %s132
      %s134 = sphi 0, %s132
      %s135 = sphi 0, %s134
      %s149 = sphi 0, %s135
      %s153 = sphi 0, %s153
      %s155 = sphi 0, %s153
      %s156 = sphi 0, %s155
      %s170 = sphi 0, %s156
      %s174 = sphi 0, %s174
      %s176 = sphi 0, %s174
      %s177 = sphi 0, %s176
      %s191 = sphi 0, %s177
      %s195 = sphi 0, %s195
      %s197 = sphi 0, %s195
      %s198 = sphi 0, %s197
      %s212 = sphi 0, %s198
      %s220 = sphi 0, %s222
      %s223 = sphi 0, %s220
      %s224 = sphi 0, %s223
      %s240 = sphi 0, %s224
    $region4: #{encoder_sub_track_c.1} parent=1 // loop_header_branch
      %17 = sbr.rel (%p15) target = $region8
    $region5: #{encoder_sub_track_c.1} parent=1 // loop_body
      %s19 = ssub.s32 %s14, 1
      %s20 = ssub.s32 %s14, 2
      %s27 = sadd.s32 1, %s22
      %p28 = scmp.ge.s32.totalorder %s27, 2
      %s29 = scalar_select %p28, 0, %s27
      %s30 = sadd.s32 1, %s21
      %s31 = scalar_select %p28, %s30, %s21
      %p32 = scmp.ge.s32.totalorder %s31, 2
      %s33 = scalar_select %p32, 0, %s31
      %s34 = ssub.s32 %s21, %s33
      %s35 = ssub.s32 %s22, %s29
      %s36 = sor.u32 %s34, %s35
      %p37 = scmp.eq.s32.totalorder %s36, 0
      %s39 = sadd.s32 %s38, 1
      %s40 = scalar_select %p37, %s38, %s39
      %p43 = pneg %p37
      %p44 = scmp.eq.s32.totalorder %s14, 3
      %p45 = por %p43, %p44
      %p46 = scmp.ne.s32.totalorder %s38, %s41
      %p47 = scmp.eq.s32.totalorder %s14, 0
      %p48 = por %p46, %p47
      %p49 = scmp.ne.s32.totalorder %s38, %s41
      %p50 = scmp.eq.s32.totalorder %s19, 3
      %p51 = por %p49, %p50
      %p52 = scmp.ne.s32.totalorder %s41, %s42
      %p53 = scmp.eq.s32.totalorder %s19, 0
      %p54 = por %p52, %p53
      %p55 = scmp.ne.s32.totalorder %s41, %s42
      %p56 = scmp.eq.s32.totalorder %s20, 3
      %p57 = por %p55, %p56
      %p59 = scmp.ne.s32.totalorder %s42, %s58
      %p60 = scmp.eq.s32.totalorder %s20, 0
      %p61 = por %p59, %p60
      %s62 = ssub.s32 %s21, %s33
      %s63 = ssub.s32 %s22, %s29
      %s64 = sor.u32 %s62, %s63
      %p65 = scmp.eq.s32.totalorder %s64, 0
      %s67 = sadd.s32 %s66, 1
      %s68 = scalar_select %p65, %s66, %s67
      %p71 = pneg %p65
      %p72 = scmp.eq.s32.totalorder %s14, 3
      %p73 = por %p71, %p72
      %p74 = scmp.ne.s32.totalorder %s66, %s69
      %p75 = scmp.eq.s32.totalorder %s14, 0
      %p76 = por %p74, %p75
      %p77 = scmp.ne.s32.totalorder %s66, %s69
      %p78 = scmp.eq.s32.totalorder %s19, 3
      %p79 = por %p77, %p78
      %p80 = scmp.ne.s32.totalorder %s69, %s70
      %p81 = scmp.eq.s32.totalorder %s19, 0
      %p82 = por %p80, %p81
      %p83 = scmp.ne.s32.totalorder %s69, %s70
      %p84 = scmp.eq.s32.totalorder %s20, 3
      %p85 = por %p83, %p84
      %p87 = scmp.ne.s32.totalorder %s70, %s86
      %p88 = scmp.eq.s32.totalorder %s20, 0
      %p89 = por %p87, %p88
      %s91 = sadd.s32 %s90, 1
      %p94 = scmp.eq.s32.totalorder %s14, 3
      %p95 = scmp.ne.s32.totalorder %s90, %s92
      %p96 = scmp.eq.s32.totalorder %s14, 0
      %p97 = por %p95, %p96
      %p98 = scmp.ne.s32.totalorder %s90, %s92
      %p99 = scmp.eq.s32.totalorder %s19, 3
      %p100 = por %p98, %p99
      %p101 = scmp.ne.s32.totalorder %s92, %s93
      %p102 = scmp.eq.s32.totalorder %s19, 0
      %p103 = por %p101, %p102
      %p104 = scmp.ne.s32.totalorder %s92, %s93
      %p105 = scmp.eq.s32.totalorder %s20, 3
      %p106 = por %p104, %p105
      %p108 = scmp.ne.s32.totalorder %s93, %s107
      %p109 = scmp.eq.s32.totalorder %s20, 0
      %p110 = por %p108, %p109
      %s112 = sadd.s32 %s111, 1
      %p115 = scmp.eq.s32.totalorder %s14, 3
      %p116 = scmp.ne.s32.totalorder %s111, %s113
      %p117 = scmp.eq.s32.totalorder %s14, 0
      %p118 = por %p116, %p117
      %p119 = scmp.ne.s32.totalorder %s111, %s113
      %p120 = scmp.eq.s32.totalorder %s19, 3
      %p121 = por %p119, %p120
      %p122 = scmp.ne.s32.totalorder %s113, %s114
      %p123 = scmp.eq.s32.totalorder %s19, 0
      %p124 = por %p122, %p123
      %p125 = scmp.ne.s32.totalorder %s113, %s114
      %p126 = scmp.eq.s32.totalorder %s20, 3
      %p127 = por %p125, %p126
      %p129 = scmp.ne.s32.totalorder %s114, %s128
      %p130 = scmp.eq.s32.totalorder %s20, 0
      %p131 = por %p129, %p130
      %s133 = sadd.s32 %s132, 1
      %p136 = scmp.eq.s32.totalorder %s14, 3
      %p137 = scmp.ne.s32.totalorder %s132, %s134
      %p138 = scmp.eq.s32.totalorder %s14, 0
      %p139 = por %p137, %p138
      %p140 = scmp.ne.s32.totalorder %s132, %s134
      %p141 = scmp.eq.s32.totalorder %s19, 3
      %p142 = por %p140, %p141
      %p143 = scmp.ne.s32.totalorder %s134, %s135
      %p144 = scmp.eq.s32.totalorder %s19, 0
      %p145 = por %p143, %p144
      %p146 = scmp.ne.s32.totalorder %s134, %s135
      %p147 = scmp.eq.s32.totalorder %s20, 3
      %p148 = por %p146, %p147
      %p150 = scmp.ne.s32.totalorder %s135, %s149
      %p151 = scmp.eq.s32.totalorder %s20, 0
      %p152 = por %p150, %p151
      %s154 = sadd.s32 %s153, 1
      %p157 = scmp.eq.s32.totalorder %s14, 3
      %p158 = scmp.ne.s32.totalorder %s153, %s155
      %p159 = scmp.eq.s32.totalorder %s14, 0
      %p160 = por %p158, %p159
      %p161 = scmp.ne.s32.totalorder %s153, %s155
      %p162 = scmp.eq.s32.totalorder %s19, 3
      %p163 = por %p161, %p162
      %p164 = scmp.ne.s32.totalorder %s155, %s156
      %p165 = scmp.eq.s32.totalorder %s19, 0
      %p166 = por %p164, %p165
      %p167 = scmp.ne.s32.totalorder %s155, %s156
      %p168 = scmp.eq.s32.totalorder %s20, 3
      %p169 = por %p167, %p168
      %p171 = scmp.ne.s32.totalorder %s156, %s170
      %p172 = scmp.eq.s32.totalorder %s20, 0
      %p173 = por %p171, %p172
      %s175 = sadd.s32 %s174, 1
      %p178 = scmp.eq.s32.totalorder %s14, 3
      %p179 = scmp.ne.s32.totalorder %s174, %s176
      %p180 = scmp.eq.s32.totalorder %s14, 0
      %p181 = por %p179, %p180
      %p182 = scmp.ne.s32.totalorder %s174, %s176
      %p183 = scmp.eq.s32.totalorder %s19, 3
      %p184 = por %p182, %p183
      %p185 = scmp.ne.s32.totalorder %s176, %s177
      %p186 = scmp.eq.s32.totalorder %s19, 0
      %p187 = por %p185, %p186
      %p188 = scmp.ne.s32.totalorder %s176, %s177
      %p189 = scmp.eq.s32.totalorder %s20, 3
      %p190 = por %p188, %p189
      %p192 = scmp.ne.s32.totalorder %s177, %s191
      %p193 = scmp.eq.s32.totalorder %s20, 0
      %p194 = por %p192, %p193
      %s196 = sadd.s32 %s195, 1
      %p199 = scmp.eq.s32.totalorder %s14, 3
      %p200 = scmp.ne.s32.totalorder %s195, %s197
      %p201 = scmp.eq.s32.totalorder %s14, 0
      %p202 = por %p200, %p201
      %p203 = scmp.ne.s32.totalorder %s195, %s197
      %p204 = scmp.eq.s32.totalorder %s19, 3
      %p205 = por %p203, %p204
      %p206 = scmp.ne.s32.totalorder %s197, %s198
      %p207 = scmp.eq.s32.totalorder %s19, 0
      %p208 = por %p206, %p207
      %p209 = scmp.ne.s32.totalorder %s197, %s198
      %p210 = scmp.eq.s32.totalorder %s20, 3
      %p211 = por %p209, %p210
      %p213 = scmp.ne.s32.totalorder %s198, %s212
      %p214 = scmp.eq.s32.totalorder %s20, 0
      %p215 = por %p213, %p214
      %s216 = ssub.s32 %s21, %s33
      %s217 = ssub.s32 %s22, %s29
      %s218 = sor.u32 %s216, %s217
      %p219 = scmp.eq.s32.totalorder %s218, 0
      %s221 = sadd.s32 %s220, 1
      %s222 = scalar_select %p219, %s220, %s221
      %p225 = pneg %p219
      %p226 = scmp.eq.s32.totalorder %s14, 3
      %p227 = por %p225, %p226
      %p228 = scmp.ne.s32.totalorder %s220, %s223
      %p229 = scmp.eq.s32.totalorder %s14, 0
      %p230 = por %p228, %p229
      %p231 = scmp.ne.s32.totalorder %s220, %s223
      %p232 = scmp.eq.s32.totalorder %s19, 3
      %p233 = por %p231, %p232
      %p234 = scmp.ne.s32.totalorder %s223, %s224
      %p235 = scmp.eq.s32.totalorder %s19, 0
      %p236 = por %p234, %p235
      %p237 = scmp.ne.s32.totalorder %s223, %s224
      %p238 = scmp.eq.s32.totalorder %s20, 3
      %p239 = por %p237, %p238
      %p241 = scmp.ne.s32.totalorder %s224, %s240
      %p242 = scmp.eq.s32.totalorder %s20, 0
      %p243 = por %p241, %p242
      %p244 = scmp.le.s32.totalorder 1, %s14
      %p245 = scmp.lt.s32.totalorder %s14, 5
      %p246 = pnand %p244, %p245
      %p247 = pneg %p246
      // Predicated region
      $region9: #{encoder_sub_track_c.1} parent=5 // pred_check
        _
      $region10: #{encoder_sub_track_c.1} parent=5 // pred_check_branch
        %249 = sbr.rel (%p246) target = $region12
      $region11: #{encoder_sub_track_c.1} parent=5 // pred_region
        %s250 = ssub.s32 %s14, 1
        // Predicated region
        $region13: #{encoder_sub_track_c.1} parent=11 // pred_check
          %p251 = pneg %p103
        $region14: #{encoder_sub_track_c.1} parent=11 // pred_check_branch
          %253 = sbr.rel (%p251) target = $region16
        $region15: #{encoder_sub_track_c.1} parent=11 // pred_region
          _
        $region16: #{encoder_sub_track_c.1} parent=11 // pred_fallthru
          _
        // Predicated region
        $region17: #{encoder_sub_track_c.1} parent=11 // pred_check
          %p254 = pneg %p124
        $region18: #{encoder_sub_track_c.1} parent=11 // pred_check_branch
          %256 = sbr.rel (%p254) target = $region20
        $region19: #{encoder_sub_track_c.1} parent=11 // pred_region
          _
        $region20: #{encoder_sub_track_c.1} parent=11 // pred_fallthru
          _
        // Predicated region
        $region21: #{encoder_sub_track_c.1} parent=11 // pred_check
          %p257 = pneg %p145
        $region22: #{encoder_sub_track_c.1} parent=11 // pred_check_branch
          %259 = sbr.rel (%p257) target = $region24
        $region23: #{encoder_sub_track_c.1} parent=11 // pred_region
          _
        $region24: #{encoder_sub_track_c.1} parent=11 // pred_fallthru
          _
        // Predicated region
        $region25: #{encoder_sub_track_c.1} parent=11 // pred_check
          %p260 = pneg %p166
        $region26: #{encoder_sub_track_c.1} parent=11 // pred_check_branch
          %262 = sbr.rel (%p260) target = $region28
        $region27: #{encoder_sub_track_c.1} parent=11 // pred_region
          _
        $region28: #{encoder_sub_track_c.1} parent=11 // pred_fallthru
          _
        // Predicated region
        $region29: #{encoder_sub_track_c.1} parent=11 // pred_check
          %p263 = pneg %p187
        $region30: #{encoder_sub_track_c.1} parent=11 // pred_check_branch
          %265 = sbr.rel (%p263) target = $region32
        $region31: #{encoder_sub_track_c.1} parent=11 // pred_region
          _
        $region32: #{encoder_sub_track_c.1} parent=11 // pred_fallthru
          _
        // Predicated region
        $region33: #{encoder_sub_track_c.1} parent=11 // pred_check
          %p266 = pneg %p208
        $region34: #{encoder_sub_track_c.1} parent=11 // pred_check_branch
          %268 = sbr.rel (%p266) target = $region36
        $region35: #{encoder_sub_track_c.1} parent=11 // pred_region
          _
        $region36: #{encoder_sub_track_c.1} parent=11 // pred_fallthru
          _
      $region12: #{encoder_sub_track_c.1} parent=5 // pred_fallthru
        _
      %p269 = scmp.lt.s32.totalorder %s14, 4
      // Predicated region
      $region37: #{encoder_sub_track_c.1} parent=5 // pred_check
        %p270 = pneg %p269
      $region38: #{encoder_sub_track_c.1} parent=5 // pred_check_branch
        %272 = sbr.rel (%p270) target = $region40
      $region39: #{encoder_sub_track_c.1} parent=5 // pred_region
        // Predicated region
        $region41: #{encoder_sub_track_c.1} parent=39 // pred_check
          %p273 = pneg %p48
        $region42: #{encoder_sub_track_c.1} parent=39 // pred_check_branch
          %275 = sbr.rel (%p273) target = $region44
        $region43: #{encoder_sub_track_c.1} parent=39 // pred_region
          %p276 = scmp.lt.s32.totalorder %s21, 1
          %s277 = scalar_select %p276, %s21, 1
          %p278 = scmp.lt.s32.totalorder %s22, 1
          %s279 = scalar_select %p278, %s22, 1
          %s280 = smul.addr %s277, 2
          %s281 = sadd.s32 %s279, %s280
          %s282 = scalar_lea.vmem %s0, %s281
        $region44: #{encoder_sub_track_c.1} parent=39 // pred_fallthru
          _
        // Predicated region
        $region45: #{encoder_sub_track_c.1} parent=39 // pred_check
          %p283 = pneg %p76
        $region46: #{encoder_sub_track_c.1} parent=39 // pred_check_branch
          %285 = sbr.rel (%p283) target = $region48
        $region47: #{encoder_sub_track_c.1} parent=39 // pred_region
          %p286 = scmp.lt.s32.totalorder %s21, 1
          %s287 = scalar_select %p286, %s21, 1
          %p288 = scmp.lt.s32.totalorder %s22, 1
          %s289 = scalar_select %p288, %s22, 1
          %s290 = smul.addr %s287, 2
          %s291 = sadd.s32 %s289, %s290
          %s292 = scalar_lea.vmem %s1, %s291
        $region48: #{encoder_sub_track_c.1} parent=39 // pred_fallthru
          _
      $region40: #{encoder_sub_track_c.1} parent=5 // pred_fallthru
        _
      %p293 = scmp.le.s32.totalorder 1, %s14
      %p294 = scmp.lt.s32.totalorder %s14, 5
      %p295 = pnand %p293, %p294
      %p296 = pneg %p295
      // Predicated region
      $region49: #{encoder_sub_track_c.1} parent=5 // pred_check
        _
      $region50: #{encoder_sub_track_c.1} parent=5 // pred_check_branch
        %298 = sbr.rel (%p295) target = $region52
      $region51: #{encoder_sub_track_c.1} parent=5 // pred_region
        %s299 = ssub.s32 %s14, 1
        %p300 = scmp.lt.s32.totalorder %s23, 1
        %s301 = scalar_select %p300, %s23, 1
        %p302 = scmp.lt.s32.totalorder %s24, 1
        %s303 = scalar_select %p302, %s24, 1
        %s304 = smul.addr %s301, 2
        %s305 = sadd.s32 %s303, %s304
        %s306 = scalar_lea.vmem %s0, %s305
        %p307 = pneg %p54
        %p308 = pneg %p51
        %p309 = scmp.lt.s32.totalorder %s23, 1
        %s310 = scalar_select %p309, %s23, 1
        %p311 = scmp.lt.s32.totalorder %s24, 1
        %s312 = scalar_select %p311, %s24, 1
        %s313 = smul.addr %s310, 2
        %s314 = sadd.s32 %s312, %s313
        %s315 = scalar_lea.vmem %s1, %s314
        %p316 = pneg %p82
        %p317 = pneg %p79
        %p318 = pneg %p103
        %p319 = pneg %p100
        %p320 = pneg %p124
        %p321 = pneg %p121
        %p322 = pneg %p145
        %p323 = pneg %p142
        %p324 = pneg %p166
        %p325 = pneg %p163
        %p326 = pneg %p187
        %p327 = pneg %p184
        %p328 = pneg %p208
        %p329 = pneg %p205
        %p330 = pneg %p236
        %p331 = pneg %p233
        %s332 = sand.u32 %s223, 1
        %s333 = sand.u32 %s223, 1
        %s334 = smul.addr %s333, 32
        %s335 = scalar_lea.vmem [#allocation2], %s334
        %p336 = scmp.lt.s32.totalorder %s23, 1
        %s337 = scalar_select %p336, %s23, 1
        %p338 = scmp.lt.s32.totalorder %s24, 1
        %s339 = scalar_select %p338, %s24, 1
        %s340 = smul.addr %s337, 2
        %s341 = sadd.s32 %s339, %s340
        %s342 = scalar_lea.vmem %s0, %s341
        %p343 = scmp.lt.s32.totalorder %s23, 1
        %s344 = scalar_select %p343, %s23, 1
        %p345 = scmp.lt.s32.totalorder %s24, 1
        %s346 = scalar_select %p345, %s24, 1
        %s347 = smul.addr %s344, 2
        %s348 = sadd.s32 %s346, %s347
        %s349 = scalar_lea.vmem %s1, %s348
        %v350 = vld [vmem:[%s342] sm:$0x1]
        %v351 = vld [vmem:[%s2] sm:$0xff]
        %353 = vset.pattern.permute.xlu0 0
        %354 = vperm.xlu0 %353, %v351
        %v355 = vpop.permute.xlu0 %354
        %v358 = vperm.slane %v350, 0
        %v360 = vmul.f32 %v355, %v358
        %v361 = vld [vmem:[%s3] sm:$0xff]
        %363 = vset.pattern.permute.xlu0 0
        %364 = vperm.xlu0 %363, %v361
        %v365 = vpop.permute.xlu0 %364
        %v367 = vadd.f32 %v360, %v365
        %v368 = vmax.f32 %v367, 0.0
        %v369 = vld [vmem:[%s4] sm:$0xff]
        %v370 = vld [vmem:[%s5] sm:$0xff]
        %372 = vset.pattern.permute.xlu0 0
        %373 = vperm.xlu0 %372, %v370
        %v374 = vpop.permute.xlu0 %373
        %vm376 = vcmask 64512
        %v378 = vsel %vm376, %v369, 0
        %380 = vmatpush.msra.mxu0 0.0
        %381 = vmatpush.msra.mxu0 0.0
        %382 = vmatpush.msra.mxu0 0.0
        %383 = vmatpush.msra.mxu0 0.0
        %384 = vmatpush.msra.mxu0 0.0
        %385 = vmatpush.msra.mxu0 0.0
        %386 = vmatpush.msra.mxu0 0.0
        %387 = vmatpush.msra.mxu0 0.0
        %388 = vmatpush.msra.mxu0 0.0
        %389 = vmatpush.msra.mxu0 0.0
        %390 = vmatpush.msra.mxu0 0.0
        %391 = vmatpush.msra.mxu0 0.0
        %392 = vmatpush.msra.mxu0 0.0
        %393 = vmatpush.msra.mxu0 0.0
        %394 = vmatpush.msra.mxu0 0.0
        %395 = vmatpush.msra.mxu0 %v368
        %396 = vmatmul.f32.gmra.mxu0 %v378
        %v397 = vpop.f32.mrf.mxu0
        %v398 = vadd.f32 %v374, %v397
        %399 = vdwg.mxu0
        %v400 = vmax.f32 %v398, 0.0
        %v401 = vld [vmem:[%s6] sm:$0xff]
        %v402 = vld [vmem:[%s6 + $0x8] sm:$0xff]
        %v403 = vld [vmem:[%s7] sm:$0xff]
        %v404 = vld [vmem:[%s7 + $0x8] sm:$0xff]
        %406 = vset.pattern.permute.xlu0 0
        %407 = vperm.xlu0 %406, %v403
        %v408 = vpop.permute.xlu0 %407
        %411 = vset.pattern.permute.xlu0 0
        %412 = vperm.xlu0 %411, %v404
        %v413 = vpop.permute.xlu0 %412
        %v416 = vsel %vm376, %v401, 0
        %v419 = vsel %vm376, %v402, 0
        %421 = vmatpush.msra.mxu0 0.0
        %422 = vmatpush.msra.mxu0 0.0
        %423 = vmatpush.msra.mxu0 0.0
        %424 = vmatpush.msra.mxu0 0.0
        %425 = vmatpush.msra.mxu0 0.0
        %426 = vmatpush.msra.mxu0 0.0
        %427 = vmatpush.msra.mxu0 0.0
        %428 = vmatpush.msra.mxu0 0.0
        %429 = vmatpush.msra.mxu0 0.0
        %430 = vmatpush.msra.mxu0 0.0
        %431 = vmatpush.msra.mxu0 0.0
        %432 = vmatpush.msra.mxu0 0.0
        %433 = vmatpush.msra.mxu0 0.0
        %434 = vmatpush.msra.mxu0 0.0
        %435 = vmatpush.msra.mxu0 0.0
        %436 = vmatpush.msra.mxu0 %v400
        %437 = vmatmul.f32.gmra.mxu0 %v416
        %v438 = vpop.f32.mrf.mxu0
        %v439 = vadd.f32 %v408, %v438
        %440 = vmatmul.f32.gmra.mxu0 %v419
        %v441 = vpop.f32.mrf.mxu0
        %v442 = vadd.f32 %v413, %v441
        %443 = vdwg.mxu0
        %v444 = vmax.f32 %v439, 0.0
        %v445 = vmax.f32 %v442, 0.0
        %446 = vst [vmem:[%s335] sm:$0xff] %v444
        %447 = vst [vmem:[%s335 + $0x8] sm:$0xff] %v445
        %v448 = vld [vmem:[%s349] sm:$0x1]
        %v449 = vld [vmem:[%s2] sm:$0xff]
        %451 = vset.pattern.permute.xlu0 0
        %452 = vperm.xlu0 %451, %v449
        %v453 = vpop.permute.xlu0 %452
        %v456 = vperm.slane %v448, 0
        %v458 = vmul.f32 %v453, %v456
        %v459 = vld [vmem:[%s3] sm:$0xff]
        %461 = vset.pattern.permute.xlu0 0
        %462 = vperm.xlu0 %461, %v459
        %v463 = vpop.permute.xlu0 %462
        %v465 = vadd.f32 %v458, %v463
        %v466 = vmax.f32 %v465, 0.0
        %v467 = vld [vmem:[%s4] sm:$0xff]
        %v468 = vld [vmem:[%s5] sm:$0xff]
        %470 = vset.pattern.permute.xlu0 0
        %471 = vperm.xlu0 %470, %v468
        %v472 = vpop.permute.xlu0 %471
        %v475 = vsel %vm376, %v467, 0
        %477 = vmatpush.msra.mxu0 0.0
        %478 = vmatpush.msra.mxu0 0.0
        %479 = vmatpush.msra.mxu0 0.0
        %480 = vmatpush.msra.mxu0 0.0
        %481 = vmatpush.msra.mxu0 0.0
        %482 = vmatpush.msra.mxu0 0.0
        %483 = vmatpush.msra.mxu0 0.0
        %484 = vmatpush.msra.mxu0 0.0
        %485 = vmatpush.msra.mxu0 0.0
        %486 = vmatpush.msra.mxu0 0.0
        %487 = vmatpush.msra.mxu0 0.0
        %488 = vmatpush.msra.mxu0 0.0
        %489 = vmatpush.msra.mxu0 0.0
        %490 = vmatpush.msra.mxu0 0.0
        %491 = vmatpush.msra.mxu0 0.0
        %492 = vmatpush.msra.mxu0 %v466
        %493 = vmatmul.f32.gmra.mxu0 %v475
        %v494 = vpop.f32.mrf.mxu0
        %v495 = vadd.f32 %v472, %v494
        %496 = vdwg.mxu0
        %v497 = vmax.f32 %v495, 0.0
        %v498 = vld [vmem:[%s6] sm:$0xff]
        %v499 = vld [vmem:[%s6 + $0x8] sm:$0xff]
        %v500 = vld [vmem:[%s7] sm:$0xff]
        %v501 = vld [vmem:[%s7 + $0x8] sm:$0xff]
        %503 = vset.pattern.permute.xlu0 0
        %504 = vperm.xlu0 %503, %v500
        %v505 = vpop.permute.xlu0 %504
        %508 = vset.pattern.permute.xlu0 0
        %509 = vperm.xlu0 %508, %v501
        %v510 = vpop.permute.xlu0 %509
        %v513 = vsel %vm376, %v498, 0
        %v516 = vsel %vm376, %v499, 0
        %518 = vmatpush.msra.mxu0 0.0
        %519 = vmatpush.msra.mxu0 0.0
        %520 = vmatpush.msra.mxu0 0.0
        %521 = vmatpush.msra.mxu0 0.0
        %522 = vmatpush.msra.mxu0 0.0
        %523 = vmatpush.msra.mxu0 0.0
        %524 = vmatpush.msra.mxu0 0.0
        %525 = vmatpush.msra.mxu0 0.0
        %526 = vmatpush.msra.mxu0 0.0
        %527 = vmatpush.msra.mxu0 0.0
        %528 = vmatpush.msra.mxu0 0.0
        %529 = vmatpush.msra.mxu0 0.0
        %530 = vmatpush.msra.mxu0 0.0
        %531 = vmatpush.msra.mxu0 0.0
        %532 = vmatpush.msra.mxu0 0.0
        %533 = vmatpush.msra.mxu0 %v497
        %534 = vmatmul.f32.gmra.mxu0 %v513
        %v535 = vpop.f32.mrf.mxu0
        %v536 = vadd.f32 %v505, %v535
        %537 = vmatmul.f32.gmra.mxu0 %v516
        %v538 = vpop.f32.mrf.mxu0
        %v539 = vadd.f32 %v510, %v538
        %540 = vdwg.mxu0
        %v541 = vmax.f32 %v536, 0.0
        %v542 = vmax.f32 %v539, 0.0
        %s543 = scalar_lea.vmem %s335, 16 [#allocation2]
        %544 = vst [vmem:[%s543] sm:$0xff] %v541
        %545 = vst [vmem:[%s543 + $0x8] sm:$0xff] %v542
        %s546 = sand.u32 %s223, 1
        %s547 = sand.u32 %s223, 1
        %s548 = smul.addr %s547, 32
        %s549 = scalar_lea.vmem [#allocation2], %s548
        // Predicated region
        $region53: #{encoder_sub_track_c.1} parent=51 // pred_check
          %p550 = pneg %p233
        $region54: #{encoder_sub_track_c.1} parent=51 // pred_check_branch
          %552 = sbr.rel (%p550) target = $region56
        $region55: #{encoder_sub_track_c.1} parent=51 // pred_region
          %s553 = smul.addr %s23, 4
          %s554 = sadd.s32 %s24, %s553
          %s555 = smul.addr %s554, 8
          %s556 = scalar_lea.vmem %s8, %s555
          // Predicated region
          $region57: #{encoder_sub_track_c.1} parent=55 // pred_check
            _
          $region58: #{encoder_sub_track_c.1} parent=55 // pred_check_branch
            %558 = sbr.rel (0) target = $region60
          $region59: #{encoder_sub_track_c.1} parent=55 // pred_region
            // Predicated region
            $region61: #{encoder_sub_track_c.1} parent=59 // pred_check
              _
            $region62: #{encoder_sub_track_c.1} parent=59 // pred_check_branch
              %560 = sbr.rel (0) target = $region64
            $region63: #{encoder_sub_track_c.1} parent=59 // pred_region
              // Predicated region
              $region76: #{encoder_sub_track_c.1} parent=63 // pred_check
                _
              $region77: #{encoder_sub_track_c.1} parent=63 // pred_check_branch
                %582 = sbr.rel (0) target = $region79
              $region78: #{encoder_sub_track_c.1} parent=63 // pred_region
                loop: start=0, step=1, limit=1
                $region80: #{encoder_sub_track_c.1} parent=78 // loop_pre_header
                  _
                $region81: #{encoder_sub_track_c.1} parent=78 // loop_header
                  %s584 = sphi 0, %s588
                  %p585 = scmp.ge.s32.totalorder %s584, 1
                  %s589 = sphi %s549, %s549
                  %s590 = sphi %s556, %s556
                $region82: #{encoder_sub_track_c.1} parent=78 // loop_header_branch
                  %587 = sbr.rel (%p585) target = $region86
                $region83: #{encoder_sub_track_c.1} parent=78 // loop_body
                  %v591 = vld [vmem:[%s589] sm:$0xff]
                  %592 = vst [vmem:[%s590] sm:$0xff] %v591
                  %v593 = vld [vmem:[%s589 + $0x8] sm:$0xff]
                  %594 = vst [vmem:[%s590 + $0x10] sm:$0xff] %v593
                  %v595 = vld [vmem:[%s589 + $0x10] sm:$0xff]
                  %596 = vst [vmem:[%s590 + $0x40] sm:$0xff] %v595
                  %v597 = vld [vmem:[%s589 + $0x18] sm:$0xff]
                  %598 = vst [vmem:[%s590 + $0x50] sm:$0xff] %v597
                $region84: #{encoder_sub_track_c.1} parent=78 // loop_footer
                  %s588 = sadd.s32 1, %s584
                $region85: #{encoder_sub_track_c.1} parent=78 // loop_footer_branch
                  %583 = sbr.rel target = $region81
                $region86: #{encoder_sub_track_c.1} parent=78 // loop_exit
                  _
              $region79: #{encoder_sub_track_c.1} parent=63 // pred_fallthru
                _
              // Predicated region
              $region87: #{encoder_sub_track_c.1} parent=63 // pred_check
                _
              $region88: #{encoder_sub_track_c.1} parent=63 // pred_check_branch
                %600 = sbr.rel target = $region90
              $region89: #{encoder_sub_track_c.1} parent=63 // pred_region
                _
              $region90: #{encoder_sub_track_c.1} parent=63 // pred_fallthru
                _
            $region64: #{encoder_sub_track_c.1} parent=59 // pred_fallthru
              _
            // Predicated region
            $region65: #{encoder_sub_track_c.1} parent=59 // pred_check
              _
            $region66: #{encoder_sub_track_c.1} parent=59 // pred_check_branch
              %562 = sbr.rel target = $region68
            $region67: #{encoder_sub_track_c.1} parent=59 // pred_region
              %s564 = ssub.s32 256, 1
              loop: start=0, step=1, limit=1
              $region69: #{encoder_sub_track_c.1} parent=67 // loop_pre_header
                _
              $region70: #{encoder_sub_track_c.1} parent=67 // loop_header
                %s566 = sphi 0, %s570
                %p567 = scmp.ge.s32.totalorder %s566, 1
                %s571 = sphi %s549, %s549
                %s572 = sphi %s556, %s556
              $region71: #{encoder_sub_track_c.1} parent=67 // loop_header_branch
                %569 = sbr.rel (%p567) target = $region75
              $region72: #{encoder_sub_track_c.1} parent=67 // loop_body
                %v573 = vld [vmem:[%s571] sm:%s564]
                %574 = vst [vmem:[%s572] sm:%s564] %v573
                %v575 = vld [vmem:[%s571 + $0x8] sm:%s564]
                %576 = vst [vmem:[%s572 + $0x10] sm:%s564] %v575
                %v577 = vld [vmem:[%s571 + $0x10] sm:%s564]
                %578 = vst [vmem:[%s572 + $0x40] sm:%s564] %v577
                %v579 = vld [vmem:[%s571 + $0x18] sm:%s564]
                %580 = vst [vmem:[%s572 + $0x50] sm:%s564] %v579
              $region73: #{encoder_sub_track_c.1} parent=67 // loop_footer
                %s570 = sadd.s32 1, %s566
              $region74: #{encoder_sub_track_c.1} parent=67 // loop_footer_branch
                %565 = sbr.rel target = $region70
              $region75: #{encoder_sub_track_c.1} parent=67 // loop_exit
                _
            $region68: #{encoder_sub_track_c.1} parent=59 // pred_fallthru
              _
          $region60: #{encoder_sub_track_c.1} parent=55 // pred_fallthru
            _
          %601 = vnop
        $region56: #{encoder_sub_track_c.1} parent=51 // pred_fallthru
          _
      $region52: #{encoder_sub_track_c.1} parent=5 // pred_fallthru
        _
      %p602 = scmp.le.s32.totalorder 2, %s14
      // Predicated region
      $region91: #{encoder_sub_track_c.1} parent=5 // pred_check
        %p603 = pneg %p602
      $region92: #{encoder_sub_track_c.1} parent=5 // pred_check_branch
        %605 = sbr.rel (%p603) target = $region94
      $region93: #{encoder_sub_track_c.1} parent=5 // pred_region
        %s606 = ssub.s32 %s14, 2
        // Predicated region
        $region95: #{encoder_sub_track_c.1} parent=93 // pred_check
          %p607 = pneg %p239
        $region96: #{encoder_sub_track_c.1} parent=93 // pred_check_branch
          %609 = sbr.rel (%p607) target = $region98
        $region97: #{encoder_sub_track_c.1} parent=93 // pred_region
          %s610 = sand.u32 %s224, 1
          %s611 = sand.u32 %s224, 1
          %s612 = smul.addr %s611, 32
          %s613 = scalar_lea.vmem [#allocation2], %s612
        $region98: #{encoder_sub_track_c.1} parent=93 // pred_fallthru
          _
      $region94: #{encoder_sub_track_c.1} parent=5 // pred_fallthru
        _
    $region6: #{encoder_sub_track_c.1} parent=1 // loop_footer
      %s18 = sadd.s32 1, %s14
    $region7: #{encoder_sub_track_c.1} parent=1 // loop_footer_branch
      %13 = sbr.rel target = $region3
    $region8: #{encoder_sub_track_c.1} parent=1 // loop_exit
      _

</llo_original>
